<compile_context>
chip_gen: v6e
topology: v6e:2x2x1
jax: 0.10.0
libtpu: 0.0.40
codegen_flags: <defaults>
</compile_context>

<pallas_src>
import jax
import jax.numpy as jnp
from jax import lax
from jax.experimental import pallas as pl
from jax.experimental.pallas import tpu as pltpu

PCA_DIMS = 40
H1 = 64
H2 = 16
OUT = 1

# Default batch tile (lanes per grid step). ~13 MiB of VMEM per step including
# double-buffered x/out and f32 intermediates; sweep 4096-16384 if desired.
DEFAULT_TILE_B = 8192


def _round_up(x, m):
    return ((x + m - 1) // m) * m


def _mlp_kernel(x_ref, w1_ref, b1_ref, w2_ref, b2_ref, w3_ref, b3_ref, o_ref):
    # x arrives in its native [TILE_B, 40] f32 layout (no wrapper relayout).
    x = x_ref[...]

    # Layer 1: contract on axis 1 of both operands (W1^T [64,40] . x [TB,40])
    # -> batch-on-lane activation [64, TB]; Mosaic handles the x relayout.
    h1 = lax.dot_general(w1_ref[...], x, (((1,), (1,)), ((), ())),
                         preferred_element_type=jnp.float32)
    h1 = jnp.maximum(h1 + b1_ref[...], 0.0)                      # [64, TB] f32

    # Layer 2: [16,64] @ [64,TB] -> [16, TB]; h1 stays f32 (MXU has huge slack).
    h2 = jnp.dot(w2_ref[...], h1, preferred_element_type=jnp.float32)
    h2 = jnp.maximum(h2 + b2_ref[...], 0.0)                      # [16, TB] f32

    # Layer 3 on VPU + XLU instead of an M=1, K=16 MXU matmul.
    z = jnp.sum(w3_ref[...] * h2, axis=0, keepdims=True) + b3_ref[...]  # [1, TB]

    # Numerically stable sigmoid on the EUP slot: exp argument is always <= 0.
    e = jnp.exp(-jnp.abs(z))
    p = pl.reciprocal(1.0 + e, approx=True)        # sigmoid(|z|)
    o_ref[...] = jnp.where(z >= 0.0, p, 1.0 - p)   # [1, TB] f32, lane-dense store


def discriminator_forward(x, params, *, tile_b=None):
    """x: [B, PCA_DIMS] float32 -> [B, 1] float32 (sigmoid probabilities)."""
    w1, b1, w2, b2, w3, b3 = params
    B = x.shape[0]

    # --- Batch tile selection (lane-aligned, never larger than padded batch).
    if tile_b is None:
        tile_b = DEFAULT_TILE_B
    b_ceil = _round_up(max(B, 1), 128)
    tile_b = _round_up(max(128, min(tile_b, b_ceil)), 128)
    # Keep num_tiles >= 2 when the batch allows it, so the "parallel" grid axis
    # can shard across both TensorCores on v7x (harmless extra step elsewhere).
    if b_ceil >= 256 and tile_b >= b_ceil:
        tile_b = _round_up((B + 1) // 2, 128)

    num_tiles = (B + tile_b - 1) // tile_b
    b_pad = num_tiles * tile_b

    # Pad the batch only if needed; single jnp.pad (no zeros+scatter pair),
    # no transpose, no dtype cast -> x is read from HBM exactly once.
    x_in = x if b_pad == B else jnp.pad(x, ((0, b_pad - B), (0, 0)))

    # Tiny VMEM-resident weights/biases; weights as [out, in], biases as [out, 1].
    w1T = w1.T.astype(jnp.float32)                  # [64, 40]
    w2T = w2.T.astype(jnp.float32)                  # [16, 64]
    w3c = w3.reshape(H2, OUT).astype(jnp.float32)   # [16,  1]
    b1c = b1.reshape(H1, 1).astype(jnp.float32)
    b2c = b2.reshape(H2, 1).astype(jnp.float32)
    b3c = b3.reshape(OUT, 1).astype(jnp.float32)

    # Scoped-VMEM budget: double-buffered x/out tiles + f32 intermediates
    # (generous), floored at 32 MiB (covers v5e's 16 MiB default for big tiles)
    # and capped at 64 MiB (v7x physical).
    est = (2 * tile_b * PCA_DIMS * 4          # x tile, double-buffered
           + 2 * tile_b * OUT * 4             # out tile, double-buffered
           + 4 * tile_b * (H1 + H2 + OUT) * 4 # f32 intermediates + temps
           + 256 * 1024)                      # weights/biases + slack
    vmem_limit = int(min(max(2 * est, 32 * 1024 * 1024), 64 * 1024 * 1024))

    outT = pl.pallas_call(
        _mlp_kernel,
        out_shape=jax.ShapeDtypeStruct((OUT, b_pad), jnp.float32),
        grid=(num_tiles,),
        in_specs=[
            # Streamed per grid step, native [B, 40] layout.
            pl.BlockSpec((tile_b, PCA_DIMS), lambda i: (i, 0)),
            # VMEM-resident weights/biases (same block every step).
            pl.BlockSpec((H1, PCA_DIMS), lambda i: (0, 0)),
            pl.BlockSpec((H1, 1), lambda i: (0, 0)),
            pl.BlockSpec((H2, H1), lambda i: (0, 0)),
            pl.BlockSpec((H2, 1), lambda i: (0, 0)),
            pl.BlockSpec((H2, OUT), lambda i: (0, 0)),
            pl.BlockSpec((OUT, 1), lambda i: (0, 0)),
        ],
        out_specs=pl.BlockSpec((OUT, tile_b), lambda i: (0, i)),
        compiler_params=pltpu.CompilerParams(
            dimension_semantics=("parallel",),
            vmem_limit_bytes=vmem_limit),
    )(x_in, w1T, b1c, w2T, b2c, w3c, b3c)

    # Strip batch padding and return in the PyTorch layout [B, 1].
    return outT[0, :B].reshape(B, OUT)


def init_params(key):
    """Deterministic init mimicking PyTorch nn.Linear defaults
    (uniform(-1/sqrt(fan_in), 1/sqrt(fan_in)) for weights and biases).
    Weights stored as [in, out], biases as [1, out] (x @ W + b semantics)."""
    keys = jax.random.split(key, 6)

    def lin(kw, kb, fan_in, fan_out):
        bound = 1.0 / jnp.sqrt(float(fan_in))
        w = jax.random.uniform(kw, (fan_in, fan_out), jnp.float32, -bound, bound)
        b = jax.random.uniform(kb, (1, fan_out), jnp.float32, -bound, bound)
        return w, b

    w1, b1 = lin(keys[0], keys[1], PCA_DIMS, H1)
    w2, b2 = lin(keys[2], keys[3], H1, H2)
    w3, b3 = lin(keys[4], keys[5], H2, OUT)
    return (w1, b1, w2, b2, w3, b3)


def _reference_forward(x, params):
    w1, b1, w2, b2, w3, b3 = params
    h1 = jnp.maximum(x @ w1 + b1, 0.0)
    h2 = jnp.maximum(h1 @ w2 + b2, 0.0)
    return jax.nn.sigmoid(h2 @ w3 + b3)


if __name__ == "__main__":
    key = jax.random.PRNGKey(0)
    k_x, k_p = jax.random.split(key)
    params = init_params(k_p)

    # Case 1: tiny batch -> single 128-lane tile (batch padded 8 -> 128).
    B1 = 8
    x1 = jax.random.normal(k_x, (B1, PCA_DIMS), dtype=jnp.float32)
    out1 = jax.block_until_ready(discriminator_forward(x1, params))
    ref1 = _reference_forward(x1, params)
    assert out1.shape == (B1, OUT)
    assert jnp.allclose(out1, ref1, atol=1e-2, rtol=0.0)

    # Case 2: multiple grid steps + ragged batch (B=300, tile_b=128 -> 3 tiles).
    B2 = 300
    x2 = jax.random.normal(jax.random.PRNGKey(1), (B2, PCA_DIMS), dtype=jnp.float32)
    out2 = jax.block_until_ready(discriminator_forward(x2, params, tile_b=128))
    ref2 = _reference_forward(x2, params)
    assert out2.shape == (B2, OUT)
    assert jnp.allclose(out2, ref2, atol=1e-2, rtol=0.0)

    # Case 3: default tile path, exercises the megacore split (2 tiles) + padding.
    B3 = 1000
    x3 = jax.random.normal(jax.random.PRNGKey(2), (B3, PCA_DIMS), dtype=jnp.float32)
    out3 = jax.block_until_ready(discriminator_forward(x3, params))
    ref3 = _reference_forward(x3, params)
    assert out3.shape == (B3, OUT)
    assert jnp.allclose(out3, ref3, atol=1e-2, rtol=0.0)

    print("KERNEL_OK")
</pallas_src>

<mosaic_0001>
module attributes {stable_mosaic.version = 11 : i64} {
  func.func @_mlp_kernel(%arg0: i32, %arg1: memref<128x40xf32, #tpu.memory_space<vmem>>, %arg2: memref<64x40xf32, #tpu.memory_space<vmem>>, %arg3: memref<64x1xf32, #tpu.memory_space<vmem>>, %arg4: memref<16x64xf32, #tpu.memory_space<vmem>>, %arg5: memref<16x1xf32, #tpu.memory_space<vmem>>, %arg6: memref<16x1xf32, #tpu.memory_space<vmem>>, %arg7: memref<1x1xf32, #tpu.memory_space<vmem>>, %arg8: memref<1x128xf32, #tpu.memory_space<vmem>>) attributes {dimension_semantics = [#tpu.dimension_semantics<parallel>], iteration_bounds = array<i64: 1>, scalar_prefetch = 0 : i64, scratch_operands = 0 : i64, tpu.core_type = #tpu.core_type<tc>, window_params = [{transform_indices = @transform_0, window_bounds = array<i64: 128, 40>}, {pipeline_mode = #tpu.pipeline_mode<synchronous>, transform_indices = @transform_1, window_bounds = array<i64: 64, 40>}, {pipeline_mode = #tpu.pipeline_mode<synchronous>, transform_indices = @transform_2, window_bounds = array<i64: 64, 1>}, {pipeline_mode = #tpu.pipeline_mode<synchronous>, transform_indices = @transform_3, window_bounds = array<i64: 16, 64>}, {pipeline_mode = #tpu.pipeline_mode<synchronous>, transform_indices = @transform_4, window_bounds = array<i64: 16, 1>}, {pipeline_mode = #tpu.pipeline_mode<synchronous>, transform_indices = @transform_5, window_bounds = array<i64: 16, 1>}, {pipeline_mode = #tpu.pipeline_mode<synchronous>, transform_indices = @transform_6, window_bounds = array<i64: 1, 1>}, {transform_indices = @transform_7, window_bounds = array<i64: 1, 128>}]} {
    %c0 = arith.constant 0 : index
    %c0_0 = arith.constant 0 : index
    %0 = vector.load %arg1[%c0, %c0_0] : memref<128x40xf32, #tpu.memory_space<vmem>>, vector<128x40xf32>
    %c0_1 = arith.constant 0 : index
    %c0_2 = arith.constant 0 : index
    %1 = vector.load %arg2[%c0_1, %c0_2] : memref<64x40xf32, #tpu.memory_space<vmem>>, vector<64x40xf32>
    %cst = arith.constant dense<0.000000e+00> : vector<64x128xf32>
    %2 = tpu.matmul %1, %0, %cst {dimension_numbers = #tpu.dot_dimension_numbers<[1], [1], [0], [0], [0, 0, 1, 0], [], []>} : vector<64x40xf32>, vector<128x40xf32>, vector<64x128xf32> -> vector<64x128xf32>
    %c0_3 = arith.constant 0 : index
    %c0_4 = arith.constant 0 : index
    %3 = vector.load %arg3[%c0_3, %c0_4] : memref<64x1xf32, #tpu.memory_space<vmem>>, vector<64x1xf32>
    %4 = vector.broadcast %3 : vector<64x1xf32> to vector<64x128xf32>
    %5 = arith.addf %2, %4 : vector<64x128xf32>
    %cst_5 = arith.constant 0.000000e+00 : f32
    %6 = vector.broadcast %cst_5 : f32 to vector<64x128xf32>
    %7 = arith.maximumf %5, %6 : vector<64x128xf32>
    %c0_6 = arith.constant 0 : index
    %c0_7 = arith.constant 0 : index
    %8 = vector.load %arg4[%c0_6, %c0_7] : memref<16x64xf32, #tpu.memory_space<vmem>>, vector<16x64xf32>
    %cst_8 = arith.constant dense<0.000000e+00> : vector<16x128xf32>
    %9 = tpu.matmul %8, %7, %cst_8 {dimension_numbers = #tpu.dot_dimension_numbers<[1], [0], [0], [1], [0, 0, 1, 1], [], []>} : vector<16x64xf32>, vector<64x128xf32>, vector<16x128xf32> -> vector<16x128xf32>
    %c0_9 = arith.constant 0 : index
    %c0_10 = arith.constant 0 : index
    %10 = vector.load %arg5[%c0_9, %c0_10] : memref<16x1xf32, #tpu.memory_space<vmem>>, vector<16x1xf32>
    %11 = vector.broadcast %10 : vector<16x1xf32> to vector<16x128xf32>
    %12 = arith.addf %9, %11 : vector<16x128xf32>
    %cst_11 = arith.constant 0.000000e+00 : f32
    %13 = vector.broadcast %cst_11 : f32 to vector<16x128xf32>
    %14 = arith.maximumf %12, %13 : vector<16x128xf32>
    %c0_12 = arith.constant 0 : index
    %c0_13 = arith.constant 0 : index
    %15 = vector.load %arg6[%c0_12, %c0_13] : memref<16x1xf32, #tpu.memory_space<vmem>>, vector<16x1xf32>
    %16 = vector.broadcast %15 : vector<16x1xf32> to vector<16x128xf32>
    %17 = arith.mulf %16, %14 : vector<16x128xf32>
    %cst_14 = arith.constant dense<0.000000e+00> : vector<128xf32>
    %18 = vector.multi_reduction <add>, %17, %cst_14 [0] : vector<16x128xf32> to vector<128xf32>
    %19 = vector.shape_cast %18 : vector<128xf32> to vector<1x128xf32>
    %c0_15 = arith.constant 0 : index
    %c0_16 = arith.constant 0 : index
    %20 = vector.load %arg7[%c0_15, %c0_16] : memref<1x1xf32, #tpu.memory_space<vmem>>, vector<1x1xf32>
    %21 = vector.broadcast %20 : vector<1x1xf32> to vector<1x128xf32>
    %22 = arith.addf %19, %21 : vector<1x128xf32>
    %23 = math.absf %22 : vector<1x128xf32>
    %cst_17 = arith.constant 0.000000e+00 : f32
    %24 = vector.broadcast %cst_17 : f32 to vector<1x128xf32>
    %25 = arith.subf %24, %23 : vector<1x128xf32>
    %26 = math.exp %25 : vector<1x128xf32>
    %cst_18 = arith.constant 1.000000e+00 : f32
    %27 = vector.broadcast %cst_18 : f32 to vector<1x128xf32>
    %28 = arith.addf %27, %26 : vector<1x128xf32>
    %29 = tpu.reciprocal %28 {approx = true} : vector<1x128xf32> -> vector<1x128xf32>
    %cst_19 = arith.constant 0.000000e+00 : f32
    %30 = vector.broadcast %cst_19 : f32 to vector<1x128xf32>
    %31 = arith.cmpf oge, %22, %30 : vector<1x128xf32>
    %cst_20 = arith.constant 1.000000e+00 : f32
    %32 = vector.broadcast %cst_20 : f32 to vector<1x128xf32>
    %33 = arith.subf %32, %29 : vector<1x128xf32>
    %34 = arith.select %31, %29, %33 : vector<1x128xi1>, vector<1x128xf32>
    %c0_21 = arith.constant 0 : index
    %c0_22 = arith.constant 0 : index
    %35 = vector.load %arg8[%c0_21, %c0_22] : memref<1x128xf32, #tpu.memory_space<vmem>>, vector<1x128xf32>
    tpu.vector_store %arg8[%c0_21, %c0_22], %34 {strides = array<i32>} : memref<1x128xf32, #tpu.memory_space<vmem>>, vector<1x128xf32>,
    return
  }
  func.func @transform_0(%arg0: i32) -> (i32, i32) {
    %c0_i32 = arith.constant 0 : i32
    %c0_i32_0 = arith.constant 0 : i32
    return %arg0, %c0_i32 : i32, i32
  }
  func.func @transform_1(%arg0: i32) -> (i32, i32) {
    %c0_i32 = arith.constant 0 : i32
    %c0_i32_0 = arith.constant 0 : i32
    %c0_i32_1 = arith.constant 0 : i32
    return %c0_i32, %c0_i32_0 : i32, i32
  }
  func.func @transform_2(%arg0: i32) -> (i32, i32) {
    %c0_i32 = arith.constant 0 : i32
    %c0_i32_0 = arith.constant 0 : i32
    %c0_i32_1 = arith.constant 0 : i32
    return %c0_i32, %c0_i32_0 : i32, i32
  }
  func.func @transform_3(%arg0: i32) -> (i32, i32) {
    %c0_i32 = arith.constant 0 : i32
    %c0_i32_0 = arith.constant 0 : i32
    %c0_i32_1 = arith.constant 0 : i32
    return %c0_i32, %c0_i32_0 : i32, i32
  }
  func.func @transform_4(%arg0: i32) -> (i32, i32) {
    %c0_i32 = arith.constant 0 : i32
    %c0_i32_0 = arith.constant 0 : i32
    %c0_i32_1 = arith.constant 0 : i32
    return %c0_i32, %c0_i32_0 : i32, i32
  }
  func.func @transform_5(%arg0: i32) -> (i32, i32) {
    %c0_i32 = arith.constant 0 : i32
    %c0_i32_0 = arith.constant 0 : i32
    %c0_i32_1 = arith.constant 0 : i32
    return %c0_i32, %c0_i32_0 : i32, i32
  }
  func.func @transform_6(%arg0: i32) -> (i32, i32) {
    %c0_i32 = arith.constant 0 : i32
    %c0_i32_0 = arith.constant 0 : i32
    %c0_i32_1 = arith.constant 0 : i32
    return %c0_i32, %c0_i32_0 : i32, i32
  }
  func.func @transform_7(%arg0: i32) -> (i32, i32) {
    %c0_i32 = arith.constant 0 : i32
    %c0_i32_0 = arith.constant 0 : i32
    return %c0_i32, %arg0 : i32, i32
  }
}

</mosaic_0001>

<llo_original>
// kernel: tpu_custom_call.1
$region0: #{tpu_custom_call.1}
  #allocation0 [shape = 'u32[]', space=smem, size = 0x4, offset = 0x4, fixed_abs, tag = 'smem constant byte address 0x4 - core index']
  #allocation1 [shape = 'u32[144,128]{1,0:T(1,128)}', space=vmem, size = 0x12000, scoped, tag = 'internal scratch']
  #allocation2 [shape = 'f32[1,1]{1,0:T(1,128)S(1)}', space=vmem, size = 0x200, scoped, tag = 'scoped memory for tpu_custom_call.1']
  %s0 = inlined_call_operand.vmem [shape: f32[128,40], index: 0, kind: input, shape index: {}]
  %s1 = inlined_call_operand.vmem [shape: f32[64,40], index: 1, kind: input, shape index: {}]
  %s2 = inlined_call_operand.vmem [shape: f32[64,1], index: 2, kind: input, shape index: {}]
  %s3 = inlined_call_operand.vmem [shape: f32[16,64], index: 3, kind: input, shape index: {}]
  %s4 = inlined_call_operand.vmem [shape: f32[16,1], index: 4, kind: input, shape index: {}]
  %s5 = inlined_call_operand.vmem [shape: f32[16,1], index: 5, kind: input, shape index: {}]
  %s6 = inlined_call_operand.<no memory space> [shape: f32[1,1], index: 6, kind: input, shape index: {}]
  %s7 = inlined_call_operand.hbm [shape: f32[1,128], index: 7, kind: output, shape index: {}]
  %s8 = sld [smem:[#allocation0]]
  $region38: #{tpu_custom_call.1} parent=0
    _
  %s10 = ssub.s32 1, %s8
  %s11 = scalar_select 0, %s10, %s8
  %v12 = vstv %s6
  %13 = vst [vmem:[#allocation2] sm:$0x1] %v12
  $region1: #{tpu_custom_call.1} parent=0
    #allocation3 [shape = 'u8[512]{0}', space=vmem, size = 0x400, scoped, tag = 'output window, operand 0, single buffered']
    #allocation4 [shape = 's32[1]{0}', space=sflag, size = 0x4, scoped, tag = 'scoped memory for tpu_custom_call.1']
    %14 = vsyncpa [#allocation4], 0
    // Predicated region
    $region2: #{tpu_custom_call.1} parent=1 // pred_check
      _
    $region3: #{tpu_custom_call.1} parent=1 // pred_check_branch
      %16 = sbr.rel (0) target = $region5
    $region4: #{tpu_custom_call.1} parent=1 // pred_region
      _
    $region5: #{tpu_custom_call.1} parent=1 // pred_fallthru
      _
    // Predicated region
    $region6: #{tpu_custom_call.1} parent=1 // pred_check
      _
    $region7: #{tpu_custom_call.1} parent=1 // pred_check_branch
      %18 = sbr.rel (0) target = $region9
    $region8: #{tpu_custom_call.1} parent=1 // pred_region
      _
    $region9: #{tpu_custom_call.1} parent=1 // pred_fallthru
      _
    // Predicated region
    $region10: #{tpu_custom_call.1} parent=1 // pred_check
      _
    $region11: #{tpu_custom_call.1} parent=1 // pred_check_branch
      %20 = sbr.rel (0) target = $region13
    $region12: #{tpu_custom_call.1} parent=1 // pred_region
      _
    $region13: #{tpu_custom_call.1} parent=1 // pred_fallthru
      _
    // Predicated region
    $region14: #{tpu_custom_call.1} parent=1 // pred_check
      _
    $region15: #{tpu_custom_call.1} parent=1 // pred_check_branch
      %22 = sbr.rel (0) target = $region17
    $region16: #{tpu_custom_call.1} parent=1 // pred_region
      _
    $region17: #{tpu_custom_call.1} parent=1 // pred_fallthru
      _
    // Predicated region
    $region18: #{tpu_custom_call.1} parent=1 // pred_check
      _
    $region19: #{tpu_custom_call.1} parent=1 // pred_check_branch
      %24 = sbr.rel (0) target = $region21
    $region20: #{tpu_custom_call.1} parent=1 // pred_region
      _
    $region21: #{tpu_custom_call.1} parent=1 // pred_fallthru
      _
    // Predicated region
    $region22: #{tpu_custom_call.1} parent=1 // pred_check
      _
    $region23: #{tpu_custom_call.1} parent=1 // pred_check_branch
      %26 = sbr.rel (0) target = $region25
    $region24: #{tpu_custom_call.1} parent=1 // pred_region
      _
    $region25: #{tpu_custom_call.1} parent=1 // pred_fallthru
      _
    // Predicated region
    $region26: #{tpu_custom_call.1} parent=1 // pred_check
      _
    $region27: #{tpu_custom_call.1} parent=1 // pred_check_branch
      %28 = sbr.rel (0) target = $region29
    $region28: #{tpu_custom_call.1} parent=1 // pred_region
      _
    $region29: #{tpu_custom_call.1} parent=1 // pred_fallthru
      _
    %v29 = vld [vmem:[%s0] sm:$0xff]
    %v30 = vld [vmem:[%s0 + $0x8] sm:$0xff]
    %v31 = vld [vmem:[%s0 + $0x10] sm:$0xff]
    %v32 = vld [vmem:[%s0 + $0x18] sm:$0xff]
    %v33 = vld [vmem:[%s0 + $0x20] sm:$0xff]
    %v34 = vld [vmem:[%s0 + $0x28] sm:$0xff]
    %v35 = vld [vmem:[%s0 + $0x30] sm:$0xff]
    %v36 = vld [vmem:[%s0 + $0x38] sm:$0xff]
    %v37 = vld [vmem:[%s0 + $0x40] sm:$0xff]
    %v38 = vld [vmem:[%s0 + $0x48] sm:$0xff]
    %v39 = vld [vmem:[%s0 + $0x50] sm:$0xff]
    %v40 = vld [vmem:[%s0 + $0x58] sm:$0xff]
    %v41 = vld [vmem:[%s0 + $0x60] sm:$0xff]
    %v42 = vld [vmem:[%s0 + $0x68] sm:$0xff]
    %v43 = vld [vmem:[%s0 + $0x70] sm:$0xff]
    %v44 = vld [vmem:[%s0 + $0x78] sm:$0xff]
    %v45 = vld [vmem:[%s1] sm:$0xff]
    %v46 = vld [vmem:[%s1 + $0x8] sm:$0xff]
    %v47 = vld [vmem:[%s1 + $0x10] sm:$0xff]
    %v48 = vld [vmem:[%s1 + $0x18] sm:$0xff]
    %v49 = vld [vmem:[%s1 + $0x20] sm:$0xff]
    %v50 = vld [vmem:[%s1 + $0x28] sm:$0xff]
    %v51 = vld [vmem:[%s1 + $0x30] sm:$0xff]
    %v52 = vld [vmem:[%s1 + $0x38] sm:$0xff]
    %v53 = vld [vmem:[%s2] sm:$0xff]
    %v54 = vld [vmem:[%s2 + $0x8] sm:$0xff]
    %v55 = vld [vmem:[%s2 + $0x10] sm:$0xff]
    %v56 = vld [vmem:[%s2 + $0x18] sm:$0xff]
    %v57 = vld [vmem:[%s2 + $0x20] sm:$0xff]
    %v58 = vld [vmem:[%s2 + $0x28] sm:$0xff]
    %v59 = vld [vmem:[%s2 + $0x30] sm:$0xff]
    %v60 = vld [vmem:[%s2 + $0x38] sm:$0xff]
    %62 = vset.pattern.permute.xlu0 0
    %63 = vperm.xlu0 %62, %v53
    %v64 = vpop.permute.xlu0 %63
    %67 = vset.pattern.permute.xlu0 0
    %68 = vperm.xlu0 %67, %v54
    %v69 = vpop.permute.xlu0 %68
    %72 = vset.pattern.permute.xlu0 0
    %73 = vperm.xlu0 %72, %v55
    %v74 = vpop.permute.xlu0 %73
    %77 = vset.pattern.permute.xlu0 0
    %78 = vperm.xlu0 %77, %v56
    %v79 = vpop.permute.xlu0 %78
    %82 = vset.pattern.permute.xlu0 0
    %83 = vperm.xlu0 %82, %v57
    %v84 = vpop.permute.xlu0 %83
    %87 = vset.pattern.permute.xlu0 0
    %88 = vperm.xlu0 %87, %v58
    %v89 = vpop.permute.xlu0 %88
    %92 = vset.pattern.permute.xlu0 0
    %93 = vperm.xlu0 %92, %v59
    %v94 = vpop.permute.xlu0 %93
    %97 = vset.pattern.permute.xlu0 0
    %98 = vperm.xlu0 %97, %v60
    %v99 = vpop.permute.xlu0 %98
    %vm101 = vcmask 326656
    %v103 = vsel %vm101, %v45, 0
    %v106 = vsel %vm101, %v46, 0
    %v109 = vsel %vm101, %v47, 0
    %v112 = vsel %vm101, %v48, 0
    %v115 = vsel %vm101, %v49, 0
    %v118 = vsel %vm101, %v50, 0
    %v121 = vsel %vm101, %v51, 0
    %v124 = vsel %vm101, %v52, 0
    %v127 = vsel %vm101, %v29, 0
    %v130 = vsel %vm101, %v30, 0
    %v133 = vsel %vm101, %v31, 0
    %v136 = vsel %vm101, %v32, 0
    %v139 = vsel %vm101, %v33, 0
    %v142 = vsel %vm101, %v34, 0
    %v145 = vsel %vm101, %v35, 0
    %v148 = vsel %vm101, %v36, 0
    %v151 = vsel %vm101, %v37, 0
    %v154 = vsel %vm101, %v38, 0
    %v157 = vsel %vm101, %v39, 0
    %v160 = vsel %vm101, %v40, 0
    %v163 = vsel %vm101, %v41, 0
    %v166 = vsel %vm101, %v42, 0
    %v169 = vsel %vm101, %v43, 0
    %v172 = vsel %vm101, %v44, 0
    %174 = vmatprep.subr.mxu0 0.0
    %175 = vmatpush1.xpose.msra.mxu0 %v172
    %176 = vmatprep.subr.mxu0 0.0
    %177 = vmatpush1.xpose.msra.mxu0 %v169
    %178 = vmatprep.subr.mxu0 0.0
    %179 = vmatpush1.xpose.msra.mxu0 %v166
    %180 = vmatprep.subr.mxu0 0.0
    %181 = vmatpush1.xpose.msra.mxu0 %v163
    %182 = vmatprep.subr.mxu0 0.0
    %183 = vmatpush1.xpose.msra.mxu0 %v160
    %184 = vmatprep.subr.mxu0 0.0
    %185 = vmatpush1.xpose.msra.mxu0 %v157
    %186 = vmatprep.subr.mxu0 0.0
    %187 = vmatpush1.xpose.msra.mxu0 %v154
    %188 = vmatprep.subr.mxu0 0.0
    %189 = vmatpush1.xpose.msra.mxu0 %v151
    %190 = vmatprep.subr.mxu0 0.0
    %191 = vmatpush1.xpose.msra.mxu0 %v148
    %192 = vmatprep.subr.mxu0 0.0
    %193 = vmatpush1.xpose.msra.mxu0 %v145
    %194 = vmatprep.subr.mxu0 0.0
    %195 = vmatpush1.xpose.msra.mxu0 %v142
    %196 = vmatprep.subr.mxu0 0.0
    %197 = vmatpush1.xpose.msra.mxu0 %v139
    %198 = vmatprep.subr.mxu0 0.0
    %199 = vmatpush1.xpose.msra.mxu0 %v136
    %200 = vmatprep.subr.mxu0 0.0
    %201 = vmatpush1.xpose.msra.mxu0 %v133
    %202 = vmatprep.subr.mxu0 0.0
    %203 = vmatpush1.xpose.msra.mxu0 %v130
    %204 = vmatprep.subr.mxu0 0.0
    %205 = vmatpush1.xpose.msra.mxu0 %v127
    %206 = vmatprep.subr.mxu0 0.0
    %207 = vmatpush2.xpose.msra.mxu0 0.0
    %208 = vmatprep.subr.mxu0 0.0
    %209 = vmatpush2.xpose.msra.mxu0 0.0
    %210 = vmatprep.subr.mxu0 0.0
    %211 = vmatpush2.xpose.msra.mxu0 0.0
    %212 = vmatprep.subr.mxu0 0.0
    %213 = vmatpush2.xpose.msra.mxu0 0.0
    %214 = vmatprep.subr.mxu0 0.0
    %215 = vmatpush2.xpose.msra.mxu0 0.0
    %216 = vmatprep.subr.mxu0 0.0
    %217 = vmatpush2.xpose.msra.mxu0 0.0
    %218 = vmatprep.subr.mxu0 0.0
    %219 = vmatpush2.xpose.msra.mxu0 0.0
    %220 = vmatprep.subr.mxu0 0.0
    %221 = vmatpush2.xpose.msra.mxu0 0.0
    %222 = vmatprep.subr.mxu0 0.0
    %223 = vmatpush2.xpose.msra.mxu0 0.0
    %224 = vmatprep.subr.mxu0 0.0
    %225 = vmatpush2.xpose.msra.mxu0 0.0
    %226 = vmatprep.subr.mxu0 0.0
    %227 = vmatpush2.xpose.msra.mxu0 0.0
    %228 = vmatprep.subr.mxu0 0.0
    %229 = vmatpush2.xpose.msra.mxu0 0.0
    %230 = vmatprep.subr.mxu0 0.0
    %231 = vmatpush2.xpose.msra.mxu0 0.0
    %232 = vmatprep.subr.mxu0 0.0
    %233 = vmatpush2.xpose.msra.mxu0 0.0
    %234 = vmatprep.subr.mxu0 0.0
    %235 = vmatpush2.xpose.msra.mxu0 0.0
    %236 = vmatprep.subr.mxu0 0.0
    %237 = vmatpush2.xpose.msra.mxu0 0.0
    %238 = vmatprep.mubr.f32.mxu0 0.0
    %239 = vmatmul.mubr.f32.gmra.mxu0 %v103
    %v240 = vpop.f32.mrf.mxu0
    %v241 = vadd.f32 %v64, %v240
    %v242 = vpop.f32.mrf.mxu0
    %243 = vmatprep.mubr.f32.mxu0 0.0
    %244 = vmatmul.mubr.f32.gmra.mxu0 %v106
    %v245 = vpop.f32.mrf.mxu0
    %v246 = vadd.f32 %v69, %v245
    %v247 = vpop.f32.mrf.mxu0
    %248 = vmatprep.mubr.f32.mxu0 0.0
    %249 = vmatmul.mubr.f32.gmra.mxu0 %v109
    %v250 = vpop.f32.mrf.mxu0
    %v251 = vadd.f32 %v74, %v250
    %v252 = vpop.f32.mrf.mxu0
    %253 = vmatprep.mubr.f32.mxu0 0.0
    %254 = vmatmul.mubr.f32.gmra.mxu0 %v112
    %v255 = vpop.f32.mrf.mxu0
    %v256 = vadd.f32 %v79, %v255
    %v257 = vpop.f32.mrf.mxu0
    %258 = vmatprep.mubr.f32.mxu0 0.0
    %259 = vmatmul.mubr.f32.gmra.mxu0 %v115
    %v260 = vpop.f32.mrf.mxu0
    %v261 = vadd.f32 %v84, %v260
    %v262 = vpop.f32.mrf.mxu0
    %263 = vmatprep.mubr.f32.mxu0 0.0
    %264 = vmatmul.mubr.f32.gmra.mxu0 %v118
    %v265 = vpop.f32.mrf.mxu0
    %v266 = vadd.f32 %v89, %v265
    %v267 = vpop.f32.mrf.mxu0
    %268 = vmatprep.mubr.f32.mxu0 0.0
    %269 = vmatmul.mubr.f32.gmra.mxu0 %v121
    %v270 = vpop.f32.mrf.mxu0
    %v271 = vadd.f32 %v94, %v270
    %v272 = vpop.f32.mrf.mxu0
    %273 = vmatprep.mubr.f32.mxu0 0.0
    %274 = vmatmul.mubr.f32.gmra.mxu0 %v124
    %v275 = vpop.f32.mrf.mxu0
    %v276 = vadd.f32 %v99, %v275
    %v277 = vpop.f32.mrf.mxu0
    %278 = vdwg.mxu0
    %v279 = vmax.f32 %v241, 0.0
    %v280 = vmax.f32 %v246, 0.0
    %v281 = vmax.f32 %v251, 0.0
    %v282 = vmax.f32 %v256, 0.0
    %v283 = vmax.f32 %v261, 0.0
    %v284 = vmax.f32 %v266, 0.0
    %v285 = vmax.f32 %v271, 0.0
    %v286 = vmax.f32 %v276, 0.0
    %v287 = vld [vmem:[%s3] sm:$0xff]
    %v288 = vld [vmem:[%s3 + $0x8] sm:$0xff]
    %v289 = vld [vmem:[%s4] sm:$0xff]
    %v290 = vld [vmem:[%s4 + $0x8] sm:$0xff]
    %292 = vset.pattern.permute.xlu0 0
    %293 = vperm.xlu0 %292, %v289
    %v294 = vpop.permute.xlu0 %293
    %297 = vset.pattern.permute.xlu0 0
    %298 = vperm.xlu0 %297, %v290
    %v299 = vpop.permute.xlu0 %298
    %vm301 = vcmask 523264
    %v303 = vsel %vm301, %v287, 0
    %v306 = vsel %vm301, %v288, 0
    %308 = vmatprep.subr.mxu0 0.0
    %309 = vmatpush1.msra.mxu0 0.0
    %310 = vmatprep.subr.mxu0 0.0
    %311 = vmatpush1.msra.mxu0 0.0
    %312 = vmatprep.subr.mxu0 0.0
    %313 = vmatpush1.msra.mxu0 0.0
    %314 = vmatprep.subr.mxu0 0.0
    %315 = vmatpush1.msra.mxu0 0.0
    %316 = vmatprep.subr.mxu0 0.0
    %317 = vmatpush1.msra.mxu0 0.0
    %318 = vmatprep.subr.mxu0 0.0
    %319 = vmatpush1.msra.mxu0 0.0
    %320 = vmatprep.subr.mxu0 0.0
    %321 = vmatpush1.msra.mxu0 0.0
    %322 = vmatprep.subr.mxu0 0.0
    %323 = vmatpush1.msra.mxu0 0.0
    %324 = vmatprep.subr.mxu0 0.0
    %325 = vmatpush1.msra.mxu0 %v286
    %326 = vmatprep.subr.mxu0 0.0
    %327 = vmatpush1.msra.mxu0 %v285
    %328 = vmatprep.subr.mxu0 0.0
    %329 = vmatpush1.msra.mxu0 %v284
    %330 = vmatprep.subr.mxu0 0.0
    %331 = vmatpush1.msra.mxu0 %v283
    %332 = vmatprep.subr.mxu0 0.0
    %333 = vmatpush1.msra.mxu0 %v282
    %334 = vmatprep.subr.mxu0 0.0
    %335 = vmatpush1.msra.mxu0 %v281
    %336 = vmatprep.subr.mxu0 0.0
    %337 = vmatpush1.msra.mxu0 %v280
    %338 = vmatprep.subr.mxu0 0.0
    %339 = vmatpush1.msra.mxu0 %v279
    %340 = vmatprep.subr.mxu0 0.0
    %341 = vmatpush2.msra.mxu0 0.0
    %342 = vmatprep.subr.mxu0 0.0
    %343 = vmatpush2.msra.mxu0 0.0
    %344 = vmatprep.subr.mxu0 0.0
    %345 = vmatpush2.msra.mxu0 0.0
    %346 = vmatprep.subr.mxu0 0.0
    %347 = vmatpush2.msra.mxu0 0.0
    %348 = vmatprep.subr.mxu0 0.0
    %349 = vmatpush2.msra.mxu0 0.0
    %350 = vmatprep.subr.mxu0 0.0
    %351 = vmatpush2.msra.mxu0 0.0
    %352 = vmatprep.subr.mxu0 0.0
    %353 = vmatpush2.msra.mxu0 0.0
    %354 = vmatprep.subr.mxu0 0.0
    %355 = vmatpush2.msra.mxu0 0.0
    %356 = vmatprep.subr.mxu0 0.0
    %357 = vmatpush2.msra.mxu0 0.0
    %358 = vmatprep.subr.mxu0 0.0
    %359 = vmatpush2.msra.mxu0 0.0
    %360 = vmatprep.subr.mxu0 0.0
    %361 = vmatpush2.msra.mxu0 0.0
    %362 = vmatprep.subr.mxu0 0.0
    %363 = vmatpush2.msra.mxu0 0.0
    %364 = vmatprep.subr.mxu0 0.0
    %365 = vmatpush2.msra.mxu0 0.0
    %366 = vmatprep.subr.mxu0 0.0
    %367 = vmatpush2.msra.mxu0 0.0
    %368 = vmatprep.subr.mxu0 0.0
    %369 = vmatpush2.msra.mxu0 0.0
    %370 = vmatprep.subr.mxu0 0.0
    %371 = vmatpush2.msra.mxu0 0.0
    %372 = vmatprep.mubr.f32.mxu0 0.0
    %373 = vmatmul.mubr.f32.gmra.mxu0 %v303
    %v374 = vpop.f32.mrf.mxu0
    %v375 = vadd.f32 %v294, %v374
    %v376 = vpop.f32.mrf.mxu0
    %377 = vmatprep.mubr.f32.mxu0 0.0
    %378 = vmatmul.mubr.f32.gmra.mxu0 %v306
    %v379 = vpop.f32.mrf.mxu0
    %v380 = vadd.f32 %v299, %v379
    %v381 = vpop.f32.mrf.mxu0
    %382 = vdwg.mxu0
    %v383 = vmax.f32 %v375, 0.0
    %v384 = vmax.f32 %v380, 0.0
    %v385 = vld [vmem:[%s5] sm:$0xff]
    %v386 = vld [vmem:[%s5 + $0x8] sm:$0xff]
    %388 = vset.pattern.permute.xlu0 0
    %389 = vperm.xlu0 %388, %v385
    %v390 = vpop.permute.xlu0 %389
    %393 = vset.pattern.permute.xlu0 0
    %394 = vperm.xlu0 %393, %v386
    %v395 = vpop.permute.xlu0 %394
    %v397 = vmul.f32 %v390, %v383
    %v398 = vmul.f32 %v395, %v384
    %v399 = vadd.f32 %v397, %v398
    %v400 = vrot.slane %v399, 4
    %v401 = vadd.f32 %v399, %v400
    %v402 = vrot.slane %v401, 2
    %v403 = vadd.f32 %v401, %v402
    %v404 = vrot.slane %v403, 1
    %v405 = vadd.f32 %v403, %v404
    %v406 = vld [vmem:[#allocation2] sm:$0x1]
    %408 = vset.pattern.permute.xlu0 0
    %409 = vperm.xlu0 %408, %v406
    %v410 = vpop.permute.xlu0 %409
    %v412 = vlaneseq
    %v413 = vshrl.u32 %v412, 7
    %v414 = vsub.s32 0, %v413
    %v415 = vrot.slane %v410, %v414
    %v416 = vadd.f32 %v405, %v415
    %v417 = vand.u32 2147483647, %v416
    %v418 = vsub.f32 0.0, %v417
    %v419 = vmul.f32 %v418, 1.442695
    %v420 = vpow.pop %v419
    %v421 = vadd.f32 %v420, 1.0
    %v422 = vrcp.pop %v421
    %vm423 = vcmp.ge.f32.partialorder %v416, 0.0
    %v424 = vsub.f32 1.0, %v422
    %v425 = vsel %vm423, %v422, %v424
    %426 = vst [vmem:[#allocation3] sm:$0x1] %v425
    // Predicated region
    $region30: #{tpu_custom_call.1} parent=1 // pred_check
      _
    $region31: #{tpu_custom_call.1} parent=1 // pred_check_branch
      %428 = sbr.rel (0) target = $region33
    $region32: #{tpu_custom_call.1} parent=1 // pred_region
      %s430 = ssub.s32 16, 16
      %431 = vsyncadd [#allocation4], %s430
      %s433 = sshll.u32 [#allocation3], 4
      %s434 = int_to_ptr.vmem [resolvable:$true] %s433
      %436 = dma.vmem_to_hbm [thread:$0]  %s434, 16, %s7, [#allocation4]
    $region33: #{tpu_custom_call.1} parent=1 // pred_fallthru
      _
    // Predicated region
    $region34: #{tpu_custom_call.1} parent=1 // pred_check
      _
    $region35: #{tpu_custom_call.1} parent=1 // pred_check_branch
      %438 = sbr.rel (0) target = $region37
    $region36: #{tpu_custom_call.1} parent=1 // pred_region
      %439 = dma.done [#allocation4], 16
    $region37: #{tpu_custom_call.1} parent=1 // pred_fallthru
      _
    %440 = vsyncpa [#allocation4], 1

</llo_original>
